<compile_context>
chip_gen: v5e
topology: v5e:2x2
jax: 0.10.0
libtpu: 0.0.40
codegen_flags: <defaults>
</compile_context>

<pallas_src>
from functools import partial

import jax
import jax.numpy as jnp
from jax import lax
from jax.experimental import pallas as pl
from jax.experimental.pallas import tpu as pltpu

_VMEM_LIMIT = 32 * 1024 * 1024          # safe on v5e/v6e (128 MiB) and v7x (64 MiB)
_FUSED_BUDGET = 12 * 1024 * 1024        # max estimated per-step footprint for fused path
_TARGET_BLOCK_BYTES = 2 * 1024 * 1024   # ~2 MiB HW tiles for the two-pass path


def _pick_hw_tile(c, hw, itemsize, target_block_bytes):
    """Pick a lane-dense (multiple of 128) HW tile for the two-pass path."""
    lanes = 128
    lane_blocks = -(-hw // lanes)
    per_lane_block_bytes = max(1, c * lanes * itemsize)
    k = max(1, min(lane_blocks, target_block_bytes // per_lane_block_bytes))
    tile = k * lanes
    return tile, -(-hw // tile)


def _mlp_gate(w1_ref, w2_ref, max_col, avg_col):
    """sigmoid(fc2(relu(fc1(max))) + fc2(relu(fc1(avg)))) as a (C, 1) column.

    fc2 has no bias, so by linearity the two branches are summed before the
    second matmul.  Weight layouts follow torch.nn.Linear: w1 = fc1.weight
    (Cr, C), w2 = fc2.weight (C, Cr).
    """
    w1 = w1_ref[...].astype(jnp.float32)
    w2 = w2_ref[...].astype(jnp.float32)
    h = (jnp.maximum(jnp.dot(w1, max_col, preferred_element_type=jnp.float32), 0.0)
         + jnp.maximum(jnp.dot(w1, avg_col, preferred_element_type=jnp.float32), 0.0))
    y = jnp.dot(w2, h, preferred_element_type=jnp.float32)        # (C, 1)
    return jax.nn.sigmoid(y)


# ---------------------------- fused single-pass ---------------------------- #

def _fused_kernel(x_ref, w1_ref, w2_ref, o_ref, *, hw):
    """One batch per grid step: pools + shared-MLP gate + rescale, one x read."""
    x = x_ref[0].astype(jnp.float32)                              # (C, HW)
    max_col = jnp.max(x, axis=1, keepdims=True)                   # (C, 1)
    avg_col = jnp.sum(x, axis=1, keepdims=True) * (1.0 / hw)      # (C, 1)
    gate = _mlp_gate(w1_ref, w2_ref, max_col, avg_col)            # (C, 1)
    o_ref[0] = (x * gate).astype(o_ref.dtype)


# ---------------------------- two-pass fallback ---------------------------- #

def _pool_gate_kernel(x_ref, w1_ref, w2_ref, gate_ref, max_ref, sum_ref, *,
                      hw, tile, ragged):
    """Pass 1: running max/avg pool over HW tiles + fused shared-MLP gate."""
    t = pl.program_id(1)

    @pl.when(t == 0)
    def _init():
        max_ref[...] = jnp.full(max_ref.shape, -jnp.inf, max_ref.dtype)
        sum_ref[...] = jnp.zeros(sum_ref.shape, sum_ref.dtype)

    x = x_ref[0].astype(jnp.float32)                              # (C, TILE)
    if ragged:
        # The final HW tile extends past the array; those lanes hold
        # unspecified pad data, so mask them out of both reductions.
        lane = lax.broadcasted_iota(jnp.int32, x.shape, 1) + t * tile
        valid = lane < hw
        x_max = jnp.where(valid, x, -jnp.inf)
        x_sum = jnp.where(valid, x, 0.0)
    else:
        x_max = x
        x_sum = x

    max_ref[...] = jnp.maximum(max_ref[...],
                               jnp.max(x_max, axis=1, keepdims=True))
    sum_ref[...] = sum_ref[...] + jnp.sum(x_sum, axis=1, keepdims=True)

    @pl.when(t == pl.num_programs(1) - 1)
    def _finish():
        gate_ref[0] = _mlp_gate(w1_ref, w2_ref,
                                max_ref[...], sum_ref[...] * (1.0 / hw))


def _scale_kernel(x_ref, gate_ref, o_ref):
    """Pass 2: out = x * gate, broadcast over the spatial (lane) axis."""
    g = gate_ref[0]                                               # (C, 1) f32
    o_ref[0] = (x_ref[0].astype(jnp.float32) * g).astype(o_ref.dtype)


# --------------------------------- wrapper --------------------------------- #

def channel_attention(x, w1, w2, *, force_two_pass=False,
                      hw_block_bytes=_TARGET_BLOCK_BYTES):
    """x: (B, C, H, W); w1: (C//ratio, C) fc1.weight; w2: (C, C//ratio) fc2.weight."""
    b, c, h, w = x.shape
    hw = h * w
    cr = w1.shape[0]
    itemsize = jnp.dtype(x.dtype).itemsize

    x_flat = x.reshape(b, c, hw)     # free: merges contiguous trailing dims
    weight_bytes = 2 * c * cr * 4

    # Estimated per-step VMEM for the fused path: double-buffered in + out
    # blocks plus two f32 temporaries of the slab.
    fused_bytes = c * hw * (4 * itemsize + 8) + weight_bytes

    if not force_two_pass and fused_bytes <= _FUSED_BUDGET:
        out_flat = pl.pallas_call(
            partial(_fused_kernel, hw=hw),
            out_shape=jax.ShapeDtypeStruct((b, c, hw), x.dtype),
            grid=(b,),
            in_specs=[
                pl.BlockSpec((1, c, hw), lambda i: (i, 0, 0)),
                pl.BlockSpec((cr, c), lambda i: (0, 0)),
                pl.BlockSpec((c, cr), lambda i: (0, 0)),
            ],
            out_specs=pl.BlockSpec((1, c, hw), lambda i: (i, 0, 0)),
            compiler_params=pltpu.CompilerParams(
                dimension_semantics=("parallel",),
                vmem_limit_bytes=_VMEM_LIMIT),
            cost_estimate=pl.CostEstimate(
                flops=3 * b * c * hw + 4 * b * c * cr,
                transcendentals=b * c,
                bytes_accessed=2 * b * c * hw * itemsize + weight_bytes),
        )(x_flat, w1, w2)
        return out_flat.reshape(b, c, h, w)

    # -------- general two-pass path (very large C*H*W slabs) -------- #
    tile, n_t = _pick_hw_tile(c, hw, itemsize, hw_block_bytes)
    ragged = (hw % tile) != 0

    # pass 1: pooled stats + shared MLP + sigmoid -> gate (B, C, 1) f32
    gate = pl.pallas_call(
        partial(_pool_gate_kernel, hw=hw, tile=tile, ragged=ragged),
        out_shape=jax.ShapeDtypeStruct((b, c, 1), jnp.float32),
        grid=(b, n_t),
        in_specs=[
            pl.BlockSpec((1, c, tile), lambda i, t: (i, 0, t)),
            pl.BlockSpec((cr, c), lambda i, t: (0, 0)),
            pl.BlockSpec((c, cr), lambda i, t: (0, 0)),
        ],
        out_specs=pl.BlockSpec((1, c, 1), lambda i, t: (i, 0, 0)),
        scratch_shapes=[
            pltpu.VMEM((c, 1), jnp.float32),   # running max
            pltpu.VMEM((c, 1), jnp.float32),   # running sum
        ],
        compiler_params=pltpu.CompilerParams(
            dimension_semantics=("parallel", "arbitrary"),
            vmem_limit_bytes=_VMEM_LIMIT),
        cost_estimate=pl.CostEstimate(
            flops=2 * b * c * hw + 4 * b * c * cr,
            transcendentals=b * c,
            bytes_accessed=b * c * hw * itemsize + weight_bytes + b * c * 4),
    )(x_flat, w1, w2)

    # pass 2: out = x * gate, lane-dense HW tiles
    out_flat = pl.pallas_call(
        _scale_kernel,
        out_shape=jax.ShapeDtypeStruct((b, c, hw), x.dtype),
        grid=(b, n_t),
        in_specs=[
            pl.BlockSpec((1, c, tile), lambda i, t: (i, 0, t)),
            pl.BlockSpec((1, c, 1), lambda i, t: (i, 0, 0)),
        ],
        out_specs=pl.BlockSpec((1, c, tile), lambda i, t: (i, 0, t)),
        compiler_params=pltpu.CompilerParams(
            dimension_semantics=("parallel", "parallel"),
            vmem_limit_bytes=_VMEM_LIMIT),
        cost_estimate=pl.CostEstimate(
            flops=b * c * hw,
            transcendentals=0,
            bytes_accessed=2 * b * c * hw * itemsize + b * c * 4),
    )(x_flat, gate)

    return out_flat.reshape(b, c, h, w)


# -------------------------------- reference -------------------------------- #

def _reference(x, w1, w2):
    b, c, h, w = x.shape
    xf = x.reshape(b, c, h * w)
    max_pool = jnp.max(xf, axis=2)                      # (B, C)
    avg_pool = jnp.mean(xf, axis=2)                     # (B, C)

    def mlp(p):
        hdn = jnp.maximum(p @ w1.T, 0.0)                # (B, Cr)
        return hdn @ w2.T                               # (B, C)

    gate = jax.nn.sigmoid(mlp(max_pool) + mlp(avg_pool))
    return x * gate[:, :, None, None]


if __name__ == "__main__":
    key = jax.random.PRNGKey(0)

    # Fused single-pass path (the common case).
    B, C, H, W = 2, 4, 16, 16
    ratio = 4
    Cr = max(1, C // ratio)
    kx, k1, k2, key = jax.random.split(key, 4)
    x = jax.random.normal(kx, (B, C, H, W), dtype=jnp.float32)
    w1 = jax.random.normal(k1, (Cr, C), dtype=jnp.float32) * 0.5   # fc1.weight
    w2 = jax.random.normal(k2, (C, Cr), dtype=jnp.float32) * 0.5   # fc2.weight

    out = channel_attention(x, w1, w2)
    jax.block_until_ready(out)
    assert out.shape == (B, C, H, W)
    assert jnp.allclose(out, _reference(x, w1, w2), atol=1e-5, rtol=1e-5)

    # Two-pass fallback with a ragged HW tail and multiple HW tiles
    # (exercises the running reduction scratch + in-kernel masking).
    B2, C2, H2, W2 = 2, 8, 23, 11          # H*W = 253: not a multiple of 128
    Cr2 = max(1, C2 // ratio)
    kx, k1, k2, key = jax.random.split(key, 4)
    x2 = jax.random.normal(kx, (B2, C2, H2, W2), dtype=jnp.float32)
    w1b = jax.random.normal(k1, (Cr2, C2), dtype=jnp.float32) * 0.5
    w2b = jax.random.normal(k2, (C2, Cr2), dtype=jnp.float32) * 0.5

    out2 = channel_attention(x2, w1b, w2b, force_two_pass=True,
                             hw_block_bytes=4096)   # tiny tiles -> 2 HW tiles
    jax.block_until_ready(out2)
    assert out2.shape == (B2, C2, H2, W2)
    assert jnp.allclose(out2, _reference(x2, w1b, w2b), atol=1e-5, rtol=1e-5)

    print("KERNEL_OK")
</pallas_src>

<mosaic_0001>
module attributes {stable_mosaic.version = 11 : i64} {
  func.func @_fused_kernel(%arg0: i32, %arg1: memref<1x4x256xf32, #tpu.memory_space<vmem>>, %arg2: memref<1x4xf32, #tpu.memory_space<vmem>>, %arg3: memref<4x1xf32, #tpu.memory_space<vmem>>, %arg4: memref<1x4x256xf32, #tpu.memory_space<vmem>>) attributes {dimension_semantics = [#tpu.dimension_semantics<parallel>], iteration_bounds = array<i64: 2>, scalar_prefetch = 0 : i64, scratch_operands = 0 : i64, tpu.core_type = #tpu.core_type<tc>, window_params = [{transform_indices = @transform_0, window_bounds = array<i64: 1, 4, 256>}, {pipeline_mode = #tpu.pipeline_mode<synchronous>, transform_indices = @transform_1, window_bounds = array<i64: 1, 4>}, {pipeline_mode = #tpu.pipeline_mode<synchronous>, transform_indices = @transform_2, window_bounds = array<i64: 4, 1>}, {transform_indices = @transform_3, window_bounds = array<i64: 1, 4, 256>}]} {
    %c0 = arith.constant 0 : index
    %c0_0 = arith.constant 0 : index
    %c0_1 = arith.constant 0 : index
    %0 = vector.load %arg1[%c0, %c0_0, %c0_1] : memref<1x4x256xf32, #tpu.memory_space<vmem>>, vector<1x4x256xf32>
    %1 = vector.shape_cast %0 : vector<1x4x256xf32> to vector<4x256xf32>
    %cst = arith.constant dense<0xFF800000> : vector<4xf32>
    %2 = vector.multi_reduction <maximumf>, %1, %cst [1] : vector<4x256xf32> to vector<4xf32>
    %3 = vector.shape_cast %2 : vector<4xf32> to vector<4x1xf32>
    %cst_2 = arith.constant dense<0.000000e+00> : vector<4xf32>
    %4 = vector.multi_reduction <add>, %1, %cst_2 [1] : vector<4x256xf32> to vector<4xf32>
    %5 = vector.shape_cast %4 : vector<4xf32> to vector<4x1xf32>
    %cst_3 = arith.constant 3.906250e-03 : f32
    %6 = vector.broadcast %cst_3 : f32 to vector<4x1xf32>
    %7 = arith.mulf %5, %6 : vector<4x1xf32>
    %c0_4 = arith.constant 0 : index
    %c0_5 = arith.constant 0 : index
    %8 = vector.load %arg2[%c0_4, %c0_5] : memref<1x4xf32, #tpu.memory_space<vmem>>, vector<1x4xf32>
    %c0_6 = arith.constant 0 : index
    %c0_7 = arith.constant 0 : index
    %9 = vector.load %arg3[%c0_6, %c0_7] : memref<4x1xf32, #tpu.memory_space<vmem>>, vector<4x1xf32>
    %cst_8 = arith.constant dense<0.000000e+00> : vector<1x1xf32>
    %10 = tpu.matmul %8, %3, %cst_8 {dimension_numbers = #tpu.dot_dimension_numbers<[1], [0], [0], [1], [0, 0, 1, 1], [], []>} : vector<1x4xf32>, vector<4x1xf32>, vector<1x1xf32> -> vector<1x1xf32>
    %cst_9 = arith.constant 0.000000e+00 : f32
    %11 = vector.broadcast %cst_9 : f32 to vector<1x1xf32>
    %12 = arith.maximumf %10, %11 : vector<1x1xf32>
    %cst_10 = arith.constant dense<0.000000e+00> : vector<1x1xf32>
    %13 = tpu.matmul %8, %7, %cst_10 {dimension_numbers = #tpu.dot_dimension_numbers<[1], [0], [0], [1], [0, 0, 1, 1], [], []>} : vector<1x4xf32>, vector<4x1xf32>, vector<1x1xf32> -> vector<1x1xf32>
    %cst_11 = arith.constant 0.000000e+00 : f32
    %14 = vector.broadcast %cst_11 : f32 to vector<1x1xf32>
    %15 = arith.maximumf %13, %14 : vector<1x1xf32>
    %16 = arith.addf %12, %15 : vector<1x1xf32>
    %cst_12 = arith.constant dense<0.000000e+00> : vector<4x1xf32>
    %17 = tpu.matmul %9, %16, %cst_12 {dimension_numbers = #tpu.dot_dimension_numbers<[1], [0], [0], [1], [0, 0, 1, 1], [], []>} : vector<4x1xf32>, vector<1x1xf32>, vector<4x1xf32> -> vector<4x1xf32>
    %18 = arith.negf %17 : vector<4x1xf32>
    %19 = math.exp %18 : vector<4x1xf32>
    %cst_13 = arith.constant 1.000000e+00 : f32
    %20 = vector.broadcast %cst_13 : f32 to vector<4x1xf32>
    %21 = arith.addf %20, %19 : vector<4x1xf32>
    %22 = arith.divf %20, %21 : vector<4x1xf32>
    %23 = vector.broadcast %22 : vector<4x1xf32> to vector<4x256xf32>
    %24 = arith.mulf %1, %23 : vector<4x256xf32>
    %c0_14 = arith.constant 0 : index
    %c0_15 = arith.constant 0 : index
    %c0_16 = arith.constant 0 : index
    %25 = vector.load %arg4[%c0_14, %c0_15, %c0_16] : memref<1x4x256xf32, #tpu.memory_space<vmem>>, vector<1x4x256xf32>
    %26 = vector.shape_cast %25 : vector<1x4x256xf32> to vector<4x256xf32>
    %27 = vector.shape_cast %24 : vector<4x256xf32> to vector<1x4x256xf32>
    tpu.vector_store %arg4[%c0_14, %c0_15, %c0_16], %27 {strides = array<i32>} : memref<1x4x256xf32, #tpu.memory_space<vmem>>, vector<1x4x256xf32>,
    return
  }
  func.func @transform_0(%arg0: i32) -> (i32, i32, i32) {
    %c0_i32 = arith.constant 0 : i32
    %c0_i32_0 = arith.constant 0 : i32
    %c0_i32_1 = arith.constant 0 : i32
    return %arg0, %c0_i32, %c0_i32_0 : i32, i32, i32
  }
  func.func @transform_1(%arg0: i32) -> (i32, i32) {
    %c0_i32 = arith.constant 0 : i32
    %c0_i32_0 = arith.constant 0 : i32
    %c0_i32_1 = arith.constant 0 : i32
    return %c0_i32, %c0_i32_0 : i32, i32
  }
  func.func @transform_2(%arg0: i32) -> (i32, i32) {
    %c0_i32 = arith.constant 0 : i32
    %c0_i32_0 = arith.constant 0 : i32
    %c0_i32_1 = arith.constant 0 : i32
    return %c0_i32, %c0_i32_0 : i32, i32
  }
  func.func @transform_3(%arg0: i32) -> (i32, i32, i32) {
    %c0_i32 = arith.constant 0 : i32
    %c0_i32_0 = arith.constant 0 : i32
    %c0_i32_1 = arith.constant 0 : i32
    return %arg0, %c0_i32, %c0_i32_0 : i32, i32, i32
  }
}

</mosaic_0001>

<llo_original>
// kernel: tpu_custom_call.1
$region0: #{tpu_custom_call.1}
  #allocation0 [shape = 'u32[]', space=smem, size = 0x4, offset = 0x4, fixed_abs, tag = 'smem constant byte address 0x4 - core index']
  #allocation1 [shape = 'u32[72,128]{1,0:T(1,128)}', space=vmem, size = 0x9000, scoped, tag = 'internal scratch']
  %s0 = inlined_call_operand.hbm [shape: f32[2,4,256], index: 0, kind: input, shape index: {}]
  %s1 = inlined_call_operand.vmem [shape: f32[1,4], index: 1, kind: input, shape index: {}]
  %s2 = inlined_call_operand.vmem [shape: f32[4,1], index: 2, kind: input, shape index: {}]
  %s3 = inlined_call_operand.hbm [shape: f32[2,4,256], index: 3, kind: output, shape index: {}]
  %s4 = sld [smem:[#allocation0]]
  $region49: #{tpu_custom_call.1} parent=0
    _
  %s6 = ssub.s32 1, %s4
  %s7 = scalar_select 0, %s6, %s4
  $region1: #{tpu_custom_call.1} parent=0
    #allocation2 [shape = 'u8[8192]{0}', space=vmem, size = 0x2000, scoped, tag = 'input window, operand 0']
    #allocation3 [shape = 's32[2]{0}', space=sflag, size = 0x8, scoped, tag = 'scoped memory for tpu_custom_call.1']
    #allocation4 [shape = 's32[2]{0}', space=sflag, size = 0x8, scoped, tag = 'scoped memory for tpu_custom_call.1']
    #allocation5 [shape = 'u8[8192]{0}', space=vmem, size = 0x2000, scoped, tag = 'output window, operand 0']
    %8 = vsyncpa [#allocation3], 0
    %s9 = scalar_lea.sflag [#allocation3], 1
    %10 = vsyncpa %s9, 0
    %11 = vsyncpa [#allocation4], 0
    %s12 = scalar_lea.sflag [#allocation4], 1
    %13 = vsyncpa %s12, 0
    loop: start=0, step=1, limit=4
    $region2: #{tpu_custom_call.1} parent=1 // loop_pre_header
      _
    $region3: #{tpu_custom_call.1} parent=1 // loop_header
      %s15 = sphi 0, %s19
      %p16 = scmp.ge.s32.totalorder %s15, 4
      %s25 = sphi 0, %s27
      %s28 = sphi 0, %s25
      %s29 = sphi 0, %s28
      %s45 = sphi 0, %s29
      %s49 = sphi 0, %s49
      %s51 = sphi 0, %s49
      %s52 = sphi 0, %s51
      %s66 = sphi 0, %s52
      %s70 = sphi 0, %s70
      %s72 = sphi 0, %s70
      %s73 = sphi 0, %s72
      %s87 = sphi 0, %s73
      %s93 = sphi 0, %s95
      %s96 = sphi 0, %s93
      %s97 = sphi 0, %s96
      %s113 = sphi 0, %s97
    $region4: #{tpu_custom_call.1} parent=1 // loop_header_branch
      %18 = sbr.rel (%p16) target = $region8
    $region5: #{tpu_custom_call.1} parent=1 // loop_body
      %s20 = ssub.s32 %s15, 1
      %s21 = ssub.s32 %s15, 2
      %s22 = sadd.s32 %s15, 1
      %s23 = ssub.s32 %s15, %s22
      %p24 = scmp.eq.s32.totalorder %s23, 0
      %s26 = sadd.s32 %s25, 1
      %s27 = scalar_select %p24, %s25, %s26
      %p30 = pneg %p24
      %p31 = scmp.eq.s32.totalorder %s15, 1
      %p32 = por %p30, %p31
      %p33 = scmp.ne.s32.totalorder %s25, %s28
      %p34 = scmp.eq.s32.totalorder %s15, 0
      %p35 = por %p33, %p34
      %p36 = scmp.ne.s32.totalorder %s25, %s28
      %p37 = scmp.eq.s32.totalorder %s20, 1
      %p38 = por %p36, %p37
      %p39 = scmp.ne.s32.totalorder %s28, %s29
      %p40 = scmp.eq.s32.totalorder %s20, 0
      %p41 = por %p39, %p40
      %p42 = scmp.ne.s32.totalorder %s28, %s29
      %p43 = scmp.eq.s32.totalorder %s21, 1
      %p44 = por %p42, %p43
      %p46 = scmp.ne.s32.totalorder %s29, %s45
      %p47 = scmp.eq.s32.totalorder %s21, 0
      %p48 = por %p46, %p47
      %s50 = sadd.s32 %s49, 1
      %p53 = scmp.eq.s32.totalorder %s15, 1
      %p54 = scmp.ne.s32.totalorder %s49, %s51
      %p55 = scmp.eq.s32.totalorder %s15, 0
      %p56 = por %p54, %p55
      %p57 = scmp.ne.s32.totalorder %s49, %s51
      %p58 = scmp.eq.s32.totalorder %s20, 1
      %p59 = por %p57, %p58
      %p60 = scmp.ne.s32.totalorder %s51, %s52
      %p61 = scmp.eq.s32.totalorder %s20, 0
      %p62 = por %p60, %p61
      %p63 = scmp.ne.s32.totalorder %s51, %s52
      %p64 = scmp.eq.s32.totalorder %s21, 1
      %p65 = por %p63, %p64
      %p67 = scmp.ne.s32.totalorder %s52, %s66
      %p68 = scmp.eq.s32.totalorder %s21, 0
      %p69 = por %p67, %p68
      %s71 = sadd.s32 %s70, 1
      %p74 = scmp.eq.s32.totalorder %s15, 1
      %p75 = scmp.ne.s32.totalorder %s70, %s72
      %p76 = scmp.eq.s32.totalorder %s15, 0
      %p77 = por %p75, %p76
      %p78 = scmp.ne.s32.totalorder %s70, %s72
      %p79 = scmp.eq.s32.totalorder %s20, 1
      %p80 = por %p78, %p79
      %p81 = scmp.ne.s32.totalorder %s72, %s73
      %p82 = scmp.eq.s32.totalorder %s20, 0
      %p83 = por %p81, %p82
      %p84 = scmp.ne.s32.totalorder %s72, %s73
      %p85 = scmp.eq.s32.totalorder %s21, 1
      %p86 = por %p84, %p85
      %p88 = scmp.ne.s32.totalorder %s73, %s87
      %p89 = scmp.eq.s32.totalorder %s21, 0
      %p90 = por %p88, %p89
      %s91 = ssub.s32 %s15, %s22
      %p92 = scmp.eq.s32.totalorder %s91, 0
      %s94 = sadd.s32 %s93, 1
      %s95 = scalar_select %p92, %s93, %s94
      %p98 = pneg %p92
      %p99 = scmp.eq.s32.totalorder %s15, 1
      %p100 = por %p98, %p99
      %p101 = scmp.ne.s32.totalorder %s93, %s96
      %p102 = scmp.eq.s32.totalorder %s15, 0
      %p103 = por %p101, %p102
      %p104 = scmp.ne.s32.totalorder %s93, %s96
      %p105 = scmp.eq.s32.totalorder %s20, 1
      %p106 = por %p104, %p105
      %p107 = scmp.ne.s32.totalorder %s96, %s97
      %p108 = scmp.eq.s32.totalorder %s20, 0
      %p109 = por %p107, %p108
      %p110 = scmp.ne.s32.totalorder %s96, %s97
      %p111 = scmp.eq.s32.totalorder %s21, 1
      %p112 = por %p110, %p111
      %p114 = scmp.ne.s32.totalorder %s97, %s113
      %p115 = scmp.eq.s32.totalorder %s21, 0
      %p116 = por %p114, %p115
      %p117 = scmp.le.s32.totalorder 1, %s15
      %p118 = scmp.lt.s32.totalorder %s15, 3
      %p119 = pnand %p117, %p118
      %p120 = pneg %p119
      // Predicated region
      $region9: #{tpu_custom_call.1} parent=5 // pred_check
        _
      $region10: #{tpu_custom_call.1} parent=5 // pred_check_branch
        %122 = sbr.rel (%p119) target = $region12
      $region11: #{tpu_custom_call.1} parent=5 // pred_region
        %s123 = ssub.s32 %s15, 1
        // Predicated region
        $region13: #{tpu_custom_call.1} parent=11 // pred_check
          %p124 = pneg %p62
        $region14: #{tpu_custom_call.1} parent=11 // pred_check_branch
          %126 = sbr.rel (%p124) target = $region16
        $region15: #{tpu_custom_call.1} parent=11 // pred_region
          _
        $region16: #{tpu_custom_call.1} parent=11 // pred_fallthru
          _
        // Predicated region
        $region17: #{tpu_custom_call.1} parent=11 // pred_check
          %p127 = pneg %p83
        $region18: #{tpu_custom_call.1} parent=11 // pred_check_branch
          %129 = sbr.rel (%p127) target = $region20
        $region19: #{tpu_custom_call.1} parent=11 // pred_region
          _
        $region20: #{tpu_custom_call.1} parent=11 // pred_fallthru
          _
      $region12: #{tpu_custom_call.1} parent=5 // pred_fallthru
        _
      %p130 = scmp.lt.s32.totalorder %s15, 2
      // Predicated region
      $region21: #{tpu_custom_call.1} parent=5 // pred_check
        %p131 = pneg %p130
      $region22: #{tpu_custom_call.1} parent=5 // pred_check_branch
        %133 = sbr.rel (%p131) target = $region24
      $region23: #{tpu_custom_call.1} parent=5 // pred_region
        // Predicated region
        $region25: #{tpu_custom_call.1} parent=23 // pred_check
          %p134 = pneg %p35
        $region26: #{tpu_custom_call.1} parent=23 // pred_check_branch
          %136 = sbr.rel (%p134) target = $region28
        $region27: #{tpu_custom_call.1} parent=23 // pred_region
          %s137 = sand.u32 %s25, 1
          %s138 = scalar_lea.sflag [#allocation3], %s137
          %s139 = sand.u32 %s25, 1
          %s140 = smul.addr %s139, 8
          %s141 = scalar_lea.vmem [#allocation2], %s140
          %143 = vsyncadd %s138, 0
          %s144 = smul.addr %s15, 2
          %s145 = smul.addr %s144, 4
          %s146 = scalar_lea.hbm %s0, %s145
          %s148 = sshll.u32 %s146, 4
          %s149 = int_to_ptr.hbm [resolvable:$true] %s148
          %s150 = sshll.u32 %s141, 4
          %s151 = int_to_ptr.vmem [resolvable:$true] %s150
          %153 = dma.hbm_to_vmem [thread:$0]  %s149, 128, %s151, %s138
        $region28: #{tpu_custom_call.1} parent=23 // pred_fallthru
          _
      $region24: #{tpu_custom_call.1} parent=5 // pred_fallthru
        _
      %p154 = scmp.le.s32.totalorder 1, %s15
      %p155 = scmp.lt.s32.totalorder %s15, 3
      %p156 = pnand %p154, %p155
      %p157 = pneg %p156
      // Predicated region
      $region29: #{tpu_custom_call.1} parent=5 // pred_check
        _
      $region30: #{tpu_custom_call.1} parent=5 // pred_check_branch
        %159 = sbr.rel (%p156) target = $region32
      $region31: #{tpu_custom_call.1} parent=5 // pred_region
        %s160 = ssub.s32 %s15, 1
        %s161 = sand.u32 %s28, 1
        %s162 = scalar_lea.sflag [#allocation3], %s161
        %s163 = sand.u32 %s28, 1
        %s164 = smul.addr %s163, 8
        %s165 = scalar_lea.vmem [#allocation2], %s164
        // Predicated region
        $region33: #{tpu_custom_call.1} parent=31 // pred_check
          %p166 = pneg %p41
        $region34: #{tpu_custom_call.1} parent=31 // pred_check_branch
          %168 = sbr.rel (%p166) target = $region36
        $region35: #{tpu_custom_call.1} parent=31 // pred_region
          %170 = dma.done %s162, 128
        $region36: #{tpu_custom_call.1} parent=31 // pred_fallthru
          _
        %s171 = sand.u32 %s28, 1
        %s172 = scalar_lea.sflag [#allocation3], %s171
        %s173 = sand.u32 %s28, 1
        %s174 = smul.addr %s173, 8
        %s175 = scalar_lea.vmem [#allocation2], %s174
        %p176 = pneg %p41
        %p177 = pneg %p38
        %p178 = pneg %p62
        %p179 = pneg %p59
        %p180 = pneg %p83
        %p181 = pneg %p80
        %p182 = pneg %p109
        %p183 = pneg %p106
        %s184 = sand.u32 %s96, 1
        %s185 = scalar_lea.sflag [#allocation4], %s184
        %s186 = sand.u32 %s96, 1
        %s187 = smul.addr %s186, 8
        %s188 = scalar_lea.vmem [#allocation5], %s187
        %v189 = vld [vmem:[%s165] sm:$0xff]
        %191 = vst [vmem:[#allocation1] ss:$2 sm:$0xff] %v189
        %v192 = vld.sshfl [vmem:[#allocation1] sm:$0xff pattern:$0x75316420]
        %v193 = vld.sshfl [vmem:[#allocation1 + $0x8] sm:$0xff pattern:$0x75316420]
        %vm196 = vcmask 1043456
        %v197 = vsel %vm196, %v192, -inf
        %v198 = vsel %vm196, %v193, -inf
        %v199 = vmax.f32 %v197, %v198
        %200 = vmax.xlane.f32.xlu0 %v199
        %v201 = vpop.xlane.xlu0 %200
        %202 = vst [vmem:[#allocation1] ss:$2 sm:$0xff] %v189
        %v203 = vld.sshfl [vmem:[#allocation1] sm:$0xff pattern:$0x75316420]
        %v204 = vld.sshfl [vmem:[#allocation1 + $0x8] sm:$0xff pattern:$0x75316420]
        %v207 = vsel %vm196, %v203, 0.0
        %v208 = vsel %vm196, %v204, 0.0
        %v209 = vadd.f32 %v207, %v208
        %210 = vadd.xlane.f32.xlu0 %v209
        %v211 = vpop.xlane.xlu0 %210
        %v212 = vmul.f32 %v211, 0.00390625
        %v213 = vld [vmem:[%s1] sm:$0x1]
        %v214 = vld [vmem:[%s2] sm:$0xf]
        %vm215 = vcmask 31744
        %v217 = vsel %vm215, %v213, 0
        %v220 = vsel %vm196, %v201, 0
        %222 = vmatpush.msra.mxu0 0.0
        %223 = vmatpush.msra.mxu0 0.0
        %224 = vmatpush.msra.mxu0 0.0
        %225 = vmatpush.msra.mxu0 0.0
        %226 = vmatpush.msra.mxu0 0.0
        %227 = vmatpush.msra.mxu0 0.0
        %228 = vmatpush.msra.mxu0 0.0
        %229 = vmatpush.msra.mxu0 0.0
        %230 = vmatpush.msra.mxu0 0.0
        %231 = vmatpush.msra.mxu0 0.0
        %232 = vmatpush.msra.mxu0 0.0
        %233 = vmatpush.msra.mxu0 0.0
        %234 = vmatpush.msra.mxu0 0.0
        %235 = vmatpush.msra.mxu0 0.0
        %236 = vmatpush.msra.mxu0 0.0
        %237 = vmatpush.msra.mxu0 %v220
        %238 = vmatmul.f32.gmra.mxu0 %v217
        %v239 = vpop.f32.mrf.mxu0
        %v240 = vadd.f32 0.0, %v239
        %241 = vdwg.mxu0
        %v242 = vmax.f32 %v240, 0.0
        %v244 = vsel %vm196, %v212, 0
        %246 = vmatpush.msra.mxu0 0.0
        %247 = vmatpush.msra.mxu0 0.0
        %248 = vmatpush.msra.mxu0 0.0
        %249 = vmatpush.msra.mxu0 0.0
        %250 = vmatpush.msra.mxu0 0.0
        %251 = vmatpush.msra.mxu0 0.0
        %252 = vmatpush.msra.mxu0 0.0
        %253 = vmatpush.msra.mxu0 0.0
        %254 = vmatpush.msra.mxu0 0.0
        %255 = vmatpush.msra.mxu0 0.0
        %256 = vmatpush.msra.mxu0 0.0
        %257 = vmatpush.msra.mxu0 0.0
        %258 = vmatpush.msra.mxu0 0.0
        %259 = vmatpush.msra.mxu0 0.0
        %260 = vmatpush.msra.mxu0 0.0
        %261 = vmatpush.msra.mxu0 %v244
        %262 = vmatmul.f32.gmra.mxu0 %v217
        %v263 = vpop.f32.mrf.mxu0
        %v264 = vadd.f32 0.0, %v263
        %265 = vdwg.mxu0
        %v266 = vmax.f32 %v264, 0.0
        %v267 = vadd.f32 %v242, %v266
        %vm268 = vcmask 7168
        %v270 = vsel %vm268, %v214, 0
        %vm272 = vcmask 1040384
        %v274 = vsel %vm272, %v267, 0
        %276 = vmatpush.msra.mxu0 0.0
        %277 = vmatpush.msra.mxu0 0.0
        %278 = vmatpush.msra.mxu0 0.0
        %279 = vmatpush.msra.mxu0 0.0
        %280 = vmatpush.msra.mxu0 0.0
        %281 = vmatpush.msra.mxu0 0.0
        %282 = vmatpush.msra.mxu0 0.0
        %283 = vmatpush.msra.mxu0 0.0
        %284 = vmatpush.msra.mxu0 0.0
        %285 = vmatpush.msra.mxu0 0.0
        %286 = vmatpush.msra.mxu0 0.0
        %287 = vmatpush.msra.mxu0 0.0
        %288 = vmatpush.msra.mxu0 0.0
        %289 = vmatpush.msra.mxu0 0.0
        %290 = vmatpush.msra.mxu0 0.0
        %291 = vmatpush.msra.mxu0 %v274
        %292 = vmatmul.f32.gmra.mxu0 %v270
        %v293 = vpop.f32.mrf.mxu0
        %v294 = vadd.f32 0.0, %v293
        %295 = vdwg.mxu0
        %v296 = vxor.u32 %v294, 2147483648
        %v297 = vmul.f32 %v296, 1.442695
        %v298 = vpow.pop %v297
        %v299 = vadd.f32 %v298, 1.0
        %v300 = vrcp.pop %v299
        %v301 = vmul.f32 %v299, %v300
        %v302 = vsub.f32 1.0, %v301
        %v303 = vmul.f32 %v300, %v302
        %v304 = vadd.f32 %v300, %v303
        %vm305 = vweird.f32 %v299
        %vm306 = vweird.f32 %v300
        %vm307 = vmor %vm305, %vm306
        %v308 = vsel %vm307, %v300, %v304
        %v309 = vand.u32 2147483647, %v299
        %vm310 = vcmp.eq.f32.partialorder %v309, 8.507059e+37
        %v311 = vand.u32 %v299, 2147483648
        %v312 = vor.u32 1.1754944e-38, %v311
        %v313 = vsel %vm310, %v312, %v308
        %v314 = vmul.f32 1.0, %v313
        %316 = vset.pattern.permute.xlu0 0
        %317 = vperm.xlu0 %316, %v314
        %v318 = vpop.permute.xlu0 %317
        %v320 = vunpack.c.l.s4 839922192
        %v321 = vunpack.c.0.s8 %v320
        %v322 = vperm.slane %v318, %v321
        %v324 = vmul.f32 %v189, %v322
        %325 = vst [vmem:[%s188] sm:$0xff] %v324
        %s326 = sand.u32 %s96, 1
        %s327 = scalar_lea.sflag [#allocation4], %s326
        %s328 = sand.u32 %s96, 1
        %s329 = smul.addr %s328, 8
        %s330 = scalar_lea.vmem [#allocation5], %s329
        // Predicated region
        $region37: #{tpu_custom_call.1} parent=31 // pred_check
          %p331 = pneg %p106
        $region38: #{tpu_custom_call.1} parent=31 // pred_check_branch
          %333 = sbr.rel (%p331) target = $region40
        $region39: #{tpu_custom_call.1} parent=31 // pred_region
          %335 = vsyncadd %s327, 0
          %s336 = smul.addr %s20, 2
          %s337 = smul.addr %s336, 4
          %s338 = scalar_lea.hbm %s3, %s337
          %s340 = sshll.u32 %s330, 4
          %s341 = int_to_ptr.vmem [resolvable:$true] %s340
          %s342 = sshll.u32 %s338, 4
          %s343 = int_to_ptr.hbm [resolvable:$true] %s342
          %345 = dma.vmem_to_hbm [thread:$0]  %s341, 128, %s343, %s327
        $region40: #{tpu_custom_call.1} parent=31 // pred_fallthru
          _
      $region32: #{tpu_custom_call.1} parent=5 // pred_fallthru
        _
      %p346 = scmp.le.s32.totalorder 2, %s15
      // Predicated region
      $region41: #{tpu_custom_call.1} parent=5 // pred_check
        %p347 = pneg %p346
      $region42: #{tpu_custom_call.1} parent=5 // pred_check_branch
        %349 = sbr.rel (%p347) target = $region44
      $region43: #{tpu_custom_call.1} parent=5 // pred_region
        %s350 = ssub.s32 %s15, 2
        // Predicated region
        $region45: #{tpu_custom_call.1} parent=43 // pred_check
          %p351 = pneg %p112
        $region46: #{tpu_custom_call.1} parent=43 // pred_check_branch
          %353 = sbr.rel (%p351) target = $region48
        $region47: #{tpu_custom_call.1} parent=43 // pred_region
          %s354 = sand.u32 %s97, 1
          %s355 = scalar_lea.sflag [#allocation4], %s354
          %s356 = sand.u32 %s97, 1
          %s357 = smul.addr %s356, 8
          %s358 = scalar_lea.vmem [#allocation5], %s357
          %360 = dma.done %s355, 128
        $region48: #{tpu_custom_call.1} parent=43 // pred_fallthru
          _
      $region44: #{tpu_custom_call.1} parent=5 // pred_fallthru
        _
    $region6: #{tpu_custom_call.1} parent=1 // loop_footer
      %s19 = sadd.s32 1, %s15
    $region7: #{tpu_custom_call.1} parent=1 // loop_footer_branch
      %14 = sbr.rel target = $region3
    $region8: #{tpu_custom_call.1} parent=1 // loop_exit
      _
    %361 = vsyncpa [#allocation3], 1
    %s362 = scalar_lea.sflag [#allocation3], 1
    %363 = vsyncpa %s362, 1
    %364 = vsyncpa [#allocation4], 1
    %s365 = scalar_lea.sflag [#allocation4], 1
    %366 = vsyncpa %s365, 1

</llo_original>
